<compile_context>
chip_gen: v7x
topology: tpu7x:2x2x1
jax: 0.10.0
libtpu: 0.0.40
codegen_flags: <defaults>
</compile_context>

<pallas_src>
import functools

import jax
import jax.numpy as jnp
from jax.experimental import pallas as pl
from jax.experimental.pallas import tpu as pltpu

_NEG = -1e30                         # "no edge" fill value (bf16-representable)
_VMEM_LIMIT = 48 * 1024 * 1024       # explicit scoped-VMEM limit (fits v5e/v6e/v7x)
_VMEM_BUDGET = 40 * 1024 * 1024      # what we allow our blocks to consume


# --------------------------------------------------------------------------
# Kernel 1: row-wise masked softmax over the dense adjacency (bf16 in/out).
# --------------------------------------------------------------------------
def _softmax_kernel(w_ref, a_ref):
    w = w_ref[...].astype(jnp.float32)                      # (tm, Np), upcast
    row_max = jnp.max(w, axis=-1, keepdims=True)
    # Completely empty (padded) rows have row_max == -1e30; use 0 there so
    # exp(w) == 0 and the row comes out all-zero.
    rm_safe = jnp.where(row_max > -1e29, row_max, 0.0)
    e = jnp.exp(w - rm_safe)                                # exactly 0 off-graph
    denom = jnp.sum(e, axis=-1, keepdims=True)
    denom = jnp.where(denom == 0.0, 1.0, denom)
    a = e * pl.reciprocal(denom, approx=True)               # EUP reciprocal
    a_ref[...] = a.astype(a_ref.dtype)                      # bf16 adjacency


# --------------------------------------------------------------------------
# Fused fast path: all layers in one kernel, A resident in VMEM.
# --------------------------------------------------------------------------
def _fused_kernel(a_ref, x_ref, o_ref, xc_ref, *, num_layers):
    # Layer 1 reads the pipelined x block directly; later layers ping-pong
    # through the bf16 VMEM scratch xc_ref.  Final layer is left in f32.
    y = jnp.dot(a_ref[...], x_ref[...], preferred_element_type=jnp.float32)
    for _ in range(num_layers - 1):
        xc_ref[...] = y.astype(xc_ref.dtype)
        y = jnp.dot(a_ref[...], xc_ref[...], preferred_element_type=jnp.float32)
    o_ref[...] = y


# --------------------------------------------------------------------------
# Fallback path: tiled per-layer spmm.
# --------------------------------------------------------------------------
def _spmm_bf16_kernel(a_ref, x_ref, o_ref, acc_ref):
    """Intermediate layer: f32 accumulate, bf16 output straight from the acc."""
    @pl.when(pl.program_id(1) == 0)
    def _():
        acc_ref[...] = jnp.zeros_like(acc_ref)

    acc_ref[...] += jnp.dot(a_ref[...], x_ref[...],
                            preferred_element_type=jnp.float32)

    @pl.when(pl.program_id(1) == pl.num_programs(1) - 1)
    def _():
        o_ref[...] = acc_ref[...].astype(o_ref.dtype)


def _spmm_f32_kernel(a_ref, x_ref, o_ref):
    """Final layer: accumulate straight into the resident f32 output block."""
    @pl.when(pl.program_id(1) == 0)
    def _():
        o_ref[...] = jnp.zeros_like(o_ref)

    o_ref[...] += jnp.dot(a_ref[...], x_ref[...],
                          preferred_element_type=jnp.float32)


# --------------------------------------------------------------------------
# Tile / path selection helpers.
# --------------------------------------------------------------------------
def _round_up(v, m):
    return (v + m - 1) // m * m


def _softmax_tile(n_pad):
    """(tm, n_pad) bf16 in + bf16 out (double-buffered) + ~f32 temps ~= 16*tm*n_pad."""
    for tm in (512, 256, 128):
        if n_pad % tm:
            continue
        if n_pad // tm == 1 and tm > 128:      # keep >=2 steps on the parallel axis
            continue
        if 16 * tm * n_pad <= _VMEM_BUDGET:
            return tm
    return 128


def _spmm_tiles(n_pad, c_pad):
    tk = 256 if n_pad % 256 == 0 else 128
    for tm in (512, 256, 128):
        if n_pad % tm:
            continue
        if n_pad // tm == 1 and tm > 128:      # >=2 steps on the "parallel" dst axis
            continue
        # A tile bf16 x2, x slab bf16 x2, out f32 x2, f32 acc scratch (worst case).
        need = (2 * tm * tk * 2 + 2 * tk * c_pad * 2
                + 2 * tm * c_pad * 4 + tm * c_pad * 4)
        if need <= _VMEM_BUDGET:
            return tm, tk
    return 128, tk


def _fused_fits(n_pad, c_pad):
    need = (2 * n_pad * n_pad * 2          # A bf16, double-buffered
            + 2 * n_pad * c_pad * 2        # x bf16 input, double-buffered
            + 2 * n_pad * c_pad * 4        # f32 output, double-buffered
            + n_pad * c_pad * 2            # bf16 ping-pong scratch
            + n_pad * c_pad * 4)           # f32 dot result temporary
    return need <= _VMEM_BUDGET


# --------------------------------------------------------------------------
# Forward pass.
# --------------------------------------------------------------------------
def lgcn_forward(x, edge_index, edge_weight, *, num_layers: int):
    """x: (N, C) float32, edge_index: (2, E) int32 [src; dst], edge_weight: (E,)."""
    if num_layers < 1:
        return x

    n, c = x.shape
    n_pad = _round_up(n, 128)
    c_pad = _round_up(c, 128)
    src, dst = edge_index[0], edge_index[1]

    # Glue: densify the sparse graph (bf16, -1e30 fill).  Duplicate (src, dst)
    # edges are not supported by the dense scatter (last write wins).
    w_dense = (jnp.full((n_pad, n_pad), _NEG, jnp.bfloat16)
               .at[dst, src].set(edge_weight.astype(jnp.bfloat16)))

    # --- Kernel 1: row-wise softmax -> normalized adjacency A (bf16) ---
    tm_s = _softmax_tile(n_pad)
    a = pl.pallas_call(
        _softmax_kernel,
        out_shape=jax.ShapeDtypeStruct((n_pad, n_pad), jnp.bfloat16),
        grid=(n_pad // tm_s,),
        in_specs=[pl.BlockSpec((tm_s, n_pad), lambda i: (i, 0))],
        out_specs=pl.BlockSpec((tm_s, n_pad), lambda i: (i, 0)),
        compiler_params=pltpu.CompilerParams(
            dimension_semantics=("parallel",),
            vmem_limit_bytes=_VMEM_LIMIT),
    )(w_dense)

    # Padded, bf16 node features (padded rows are zero -> contribute nothing).
    xp = (jnp.zeros((n_pad, c_pad), jnp.bfloat16)
          .at[:n, :c].set(x.astype(jnp.bfloat16)))

    if _fused_fits(n_pad, c_pad):
        # --- Fused fast path: A resident in VMEM, all layers in one call ---
        out = pl.pallas_call(
            functools.partial(_fused_kernel, num_layers=num_layers),
            out_shape=jax.ShapeDtypeStruct((n_pad, c_pad), jnp.float32),
            grid=(1,),
            in_specs=[
                pl.BlockSpec((n_pad, n_pad), lambda i: (0, 0)),   # A (bf16)
                pl.BlockSpec((n_pad, c_pad), lambda i: (0, 0)),   # x0 (bf16)
            ],
            out_specs=pl.BlockSpec((n_pad, c_pad), lambda i: (0, 0)),
            scratch_shapes=[pltpu.VMEM((n_pad, c_pad), jnp.bfloat16)],
            compiler_params=pltpu.CompilerParams(
                dimension_semantics=("arbitrary",),
                vmem_limit_bytes=_VMEM_LIMIT),
        )(a, xp)
        return out[:n, :c]

    # --- Fallback: tiled per-layer spmm (layers are sequential) ---
    tm, tk = _spmm_tiles(n_pad, c_pad)
    grid = (n_pad // tm, n_pad // tk)
    a_spec = pl.BlockSpec((tm, tk), lambda i, k: (i, k))
    x_spec = pl.BlockSpec((tk, c_pad), lambda i, k: (k, 0))
    o_spec = pl.BlockSpec((tm, c_pad), lambda i, k: (i, 0))
    cp = pltpu.CompilerParams(dimension_semantics=("parallel", "arbitrary"),
                              vmem_limit_bytes=_VMEM_LIMIT)

    spmm_mid = pl.pallas_call(
        _spmm_bf16_kernel,
        out_shape=jax.ShapeDtypeStruct((n_pad, c_pad), jnp.bfloat16),
        grid=grid, in_specs=[a_spec, x_spec], out_specs=o_spec,
        scratch_shapes=[pltpu.VMEM((tm, c_pad), jnp.float32)],
        compiler_params=cp)

    spmm_last = pl.pallas_call(
        _spmm_f32_kernel,
        out_shape=jax.ShapeDtypeStruct((n_pad, c_pad), jnp.float32),
        grid=grid, in_specs=[a_spec, x_spec], out_specs=o_spec,
        compiler_params=cp)

    xb = xp
    for _ in range(num_layers - 1):
        xb = spmm_mid(a, xb)          # bf16 out, no wrapper-side astype
    out = spmm_last(a, xb)            # f32 final layer
    return out[:n, :c]


# --------------------------------------------------------------------------
# Pure-JAX f32 reference (torch_geometric scatter-softmax + add aggregation).
# --------------------------------------------------------------------------
def lgcn_reference(x, edge_index, edge_weight, *, num_layers: int):
    n = x.shape[0]
    src, dst = edge_index[0], edge_index[1]
    mx = jax.ops.segment_max(edge_weight, dst, num_segments=n)
    e = jnp.exp(edge_weight - mx[dst])
    s = jax.ops.segment_sum(e, dst, num_segments=n)
    w = e / s[dst]
    for _ in range(num_layers):
        msg = w[:, None] * x[src]
        x = jax.ops.segment_sum(msg, dst, num_segments=n)
    return x


if __name__ == "__main__":
    # Small deterministic problem: N=64 nodes, C=32 channels, 2 layers.
    N, C = 64, 32
    NUM_LAYERS = 2

    key = jax.random.PRNGKey(0)
    kx, kw = jax.random.split(key)
    x = jax.random.normal(kx, (N, C), dtype=jnp.float32)

    # Deterministic, duplicate-free edge set: node i receives edges from
    # (i+1)%N, (i+2)%N, (i+5)%N.
    dst = jnp.repeat(jnp.arange(N, dtype=jnp.int32), 3)
    offs = jnp.tile(jnp.array([1, 2, 5], dtype=jnp.int32), N)
    src = (dst + offs) % N
    edge_index = jnp.stack([src, dst], axis=0)               # (2, E)
    edge_weight = jax.random.normal(kw, (src.shape[0],), dtype=jnp.float32)

    out = lgcn_forward(x, edge_index, edge_weight, num_layers=NUM_LAYERS)
    out = jax.block_until_ready(out)

    ref = lgcn_reference(x, edge_index, edge_weight, num_layers=NUM_LAYERS)
    assert out.shape == (N, C)
    # Tolerance accounts for bf16 edge weights / adjacency / features on the
    # MXU with f32 accumulation.
    assert jnp.allclose(out, ref, atol=5e-2, rtol=5e-2), "mismatch vs reference"

    print("KERNEL_OK")
</pallas_src>

<mosaic_0001>
module attributes {stable_mosaic.version = 11 : i64} {
  func.func @_softmax_kernel(%arg0: i32, %arg1: memref<128x128xbf16, #tpu.memory_space<vmem>>, %arg2: memref<128x128xbf16, #tpu.memory_space<vmem>>) attributes {dimension_semantics = [#tpu.dimension_semantics<parallel>], iteration_bounds = array<i64: 1>, scalar_prefetch = 0 : i64, scratch_operands = 0 : i64, tpu.core_type = #tpu.core_type<tc>, window_params = [{transform_indices = @transform_0, window_bounds = array<i64: 128, 128>}, {transform_indices = @transform_1, window_bounds = array<i64: 128, 128>}]} {
    %c0 = arith.constant 0 : index
    %c0_0 = arith.constant 0 : index
    %0 = vector.load %arg1[%c0, %c0_0] : memref<128x128xbf16, #tpu.memory_space<vmem>>, vector<128x128xbf16>
    %1 = arith.extf %0 : vector<128x128xbf16> to vector<128x128xf32>
    %cst = arith.constant dense<0xFF800000> : vector<128xf32>
    %2 = vector.multi_reduction <maximumf>, %1, %cst [1] : vector<128x128xf32> to vector<128xf32>
    %3 = vector.shape_cast %2 : vector<128xf32> to vector<128x1xf32>
    %cst_1 = arith.constant -1.000000e+29 : f32
    %4 = vector.broadcast %cst_1 : f32 to vector<128x1xf32>
    %5 = arith.cmpf ogt, %3, %4 : vector<128x1xf32>
    %cst_2 = arith.constant 0.000000e+00 : f32
    %6 = vector.broadcast %cst_2 : f32 to vector<128x1xf32>
    %7 = arith.select %5, %3, %6 : vector<128x1xi1>, vector<128x1xf32>
    %8 = vector.broadcast %7 : vector<128x1xf32> to vector<128x128xf32>
    %9 = arith.subf %1, %8 : vector<128x128xf32>
    %10 = math.exp %9 : vector<128x128xf32>
    %cst_3 = arith.constant dense<0.000000e+00> : vector<128xf32>
    %11 = vector.multi_reduction <add>, %10, %cst_3 [1] : vector<128x128xf32> to vector<128xf32>
    %12 = vector.shape_cast %11 : vector<128xf32> to vector<128x1xf32>
    %cst_4 = arith.constant 0.000000e+00 : f32
    %13 = vector.broadcast %cst_4 : f32 to vector<128x1xf32>
    %14 = arith.cmpf oeq, %12, %13 : vector<128x1xf32>
    %cst_5 = arith.constant 1.000000e+00 : f32
    %15 = vector.broadcast %cst_5 : f32 to vector<128x1xf32>
    %16 = arith.select %14, %15, %12 : vector<128x1xi1>, vector<128x1xf32>
    %17 = tpu.reciprocal %16 {approx = true} : vector<128x1xf32> -> vector<128x1xf32>
    %18 = vector.broadcast %17 : vector<128x1xf32> to vector<128x128xf32>
    %19 = arith.mulf %10, %18 : vector<128x128xf32>
    %20 = arith.truncf %19 : vector<128x128xf32> to vector<128x128xbf16>
    %c0_6 = arith.constant 0 : index
    %c0_7 = arith.constant 0 : index
    %21 = vector.load %arg2[%c0_6, %c0_7] : memref<128x128xbf16, #tpu.memory_space<vmem>>, vector<128x128xbf16>
    tpu.vector_store %arg2[%c0_6, %c0_7], %20 {strides = array<i32>} : memref<128x128xbf16, #tpu.memory_space<vmem>>, vector<128x128xbf16>,
    return
  }
  func.func @transform_0(%arg0: i32) -> (i32, i32) {
    %c0_i32 = arith.constant 0 : i32
    %c0_i32_0 = arith.constant 0 : i32
    return %arg0, %c0_i32 : i32, i32
  }
  func.func @transform_1(%arg0: i32) -> (i32, i32) {
    %c0_i32 = arith.constant 0 : i32
    %c0_i32_0 = arith.constant 0 : i32
    return %arg0, %c0_i32 : i32, i32
  }
}

</mosaic_0001>

<llo_original>
// kernel: tpu_custom_call.1
$region0: #{tpu_custom_call.1}
  #allocation0 [shape = 'u32[]', space=smem, size = 0x4, offset = 0x4, fixed_abs, tag = 'smem constant byte address 0x4 - core index']
  #allocation1 [shape = 'u32[144,128]{1,0:T(1,128)}', space=vmem, size = 0x12000, scoped, tag = 'internal scratch']
  %s0 = inlined_call_operand.hbm [shape: bf16[128,128], index: 0, kind: input, shape index: {}]
  %s1 = inlined_call_operand.hbm [shape: bf16[128,128], index: 1, kind: output, shape index: {}]
  %s2 = sld [smem:[#allocation0]]
  $region18: #{tpu_custom_call.1} parent=0
    _
  %s4 = ssub.s32 1, %s2
  %s5 = scalar_select 0, %s4, %s2
  $region1: #{tpu_custom_call.1} parent=0
    #allocation2 [shape = 'u8[32768]{0}', space=vmem, size = 0x8000, scoped, tag = 'input window, operand 0, single buffered']
    #allocation3 [shape = 's32[1]{0}', space=sflag, size = 0x4, scoped, tag = 'scoped memory for tpu_custom_call.1']
    #allocation4 [shape = 's32[1]{0}', space=sflag, size = 0x4, scoped, tag = 'scoped memory for tpu_custom_call.1']
    #allocation5 [shape = 'u8[32768]{0}', space=vmem, size = 0x8000, scoped, tag = 'output window, operand 0, single buffered']
    %6 = vsyncpa [#allocation3], 0
    %7 = vsyncpa [#allocation4], 0
    // Predicated region
    $region2: #{tpu_custom_call.1} parent=1 // pred_check
      _
    $region3: #{tpu_custom_call.1} parent=1 // pred_check_branch
      %9 = sbr.rel (0) target = $region5
    $region4: #{tpu_custom_call.1} parent=1 // pred_region
      %s11 = ssub.s32 1024, 1024
      %12 = vsyncadd [#allocation3], %s11
      %s13 = sshll.u32 [#allocation2], 4
      %s14 = int_to_ptr.vmem [resolvable:$true] %s13
      %19 = dma.hbm_to_vmem [thread:$0]  %s0, 1024, %s14, [#allocation3], 64, 64, 4
    $region5: #{tpu_custom_call.1} parent=1 // pred_fallthru
      _
    // Predicated region
    $region6: #{tpu_custom_call.1} parent=1 // pred_check
      _
    $region7: #{tpu_custom_call.1} parent=1 // pred_check_branch
      %21 = sbr.rel (0) target = $region9
    $region8: #{tpu_custom_call.1} parent=1 // pred_region
      %22 = dma.done [#allocation3], 1024
    $region9: #{tpu_custom_call.1} parent=1 // pred_fallthru
      _
    %v23 = vld [vmem:[#allocation2] sm:$0xf]
    %v24 = vld [vmem:[#allocation2 + $0x4] sm:$0xf]
    %v25 = vld [vmem:[#allocation2 + $0x8] sm:$0xf]
    %v26 = vld [vmem:[#allocation2 + $0xc] sm:$0xf]
    %v27 = vld [vmem:[#allocation2 + $0x10] sm:$0xf]
    %v28 = vld [vmem:[#allocation2 + $0x14] sm:$0xf]
    %v29 = vld [vmem:[#allocation2 + $0x18] sm:$0xf]
    %v30 = vld [vmem:[#allocation2 + $0x1c] sm:$0xf]
    %v31 = vld [vmem:[#allocation2 + $0x20] sm:$0xf]
    %v32 = vld [vmem:[#allocation2 + $0x24] sm:$0xf]
    %v33 = vld [vmem:[#allocation2 + $0x28] sm:$0xf]
    %v34 = vld [vmem:[#allocation2 + $0x2c] sm:$0xf]
    %v35 = vld [vmem:[#allocation2 + $0x30] sm:$0xf]
    %v36 = vld [vmem:[#allocation2 + $0x34] sm:$0xf]
    %v37 = vld [vmem:[#allocation2 + $0x38] sm:$0xf]
    %v38 = vld [vmem:[#allocation2 + $0x3c] sm:$0xf]
    %v39 = vunpack.c.l.bf16 %v23
    %v40 = vunpack.c.l.bf16 %v24
    %v41 = vunpack.c.l.bf16 %v25
    %v42 = vunpack.c.l.bf16 %v26
    %v43 = vunpack.c.l.bf16 %v27
    %v44 = vunpack.c.l.bf16 %v28
    %v45 = vunpack.c.l.bf16 %v29
    %v46 = vunpack.c.l.bf16 %v30
    %v47 = vunpack.c.l.bf16 %v31
    %v48 = vunpack.c.l.bf16 %v32
    %v49 = vunpack.c.l.bf16 %v33
    %v50 = vunpack.c.l.bf16 %v34
    %v51 = vunpack.c.l.bf16 %v35
    %v52 = vunpack.c.l.bf16 %v36
    %v53 = vunpack.c.l.bf16 %v37
    %v54 = vunpack.c.l.bf16 %v38
    %55 = vmax.xlane.f32.xlu0 %v39
    %v56 = vpop.xlane.xlu0 %55
    %57 = vmax.xlane.f32.xlu0 %v40
    %v58 = vpop.xlane.xlu0 %57
    %59 = vmax.xlane.f32.xlu0 %v41
    %v60 = vpop.xlane.xlu0 %59
    %61 = vmax.xlane.f32.xlu0 %v42
    %v62 = vpop.xlane.xlu0 %61
    %63 = vmax.xlane.f32.xlu0 %v43
    %v64 = vpop.xlane.xlu0 %63
    %65 = vmax.xlane.f32.xlu0 %v44
    %v66 = vpop.xlane.xlu0 %65
    %67 = vmax.xlane.f32.xlu0 %v45
    %v68 = vpop.xlane.xlu0 %67
    %69 = vmax.xlane.f32.xlu0 %v46
    %v70 = vpop.xlane.xlu0 %69
    %71 = vmax.xlane.f32.xlu0 %v47
    %v72 = vpop.xlane.xlu0 %71
    %73 = vmax.xlane.f32.xlu0 %v48
    %v74 = vpop.xlane.xlu0 %73
    %75 = vmax.xlane.f32.xlu0 %v49
    %v76 = vpop.xlane.xlu0 %75
    %77 = vmax.xlane.f32.xlu0 %v50
    %v78 = vpop.xlane.xlu0 %77
    %79 = vmax.xlane.f32.xlu0 %v51
    %v80 = vpop.xlane.xlu0 %79
    %81 = vmax.xlane.f32.xlu0 %v52
    %v82 = vpop.xlane.xlu0 %81
    %83 = vmax.xlane.f32.xlu0 %v53
    %v84 = vpop.xlane.xlu0 %83
    %85 = vmax.xlane.f32.xlu0 %v54
    %v86 = vpop.xlane.xlu0 %85
    %vm87 = vcmp.gt.f32.partialorder %v56, -1e+29
    %vm88 = vcmp.gt.f32.partialorder %v58, -1e+29
    %vm89 = vcmp.gt.f32.partialorder %v60, -1e+29
    %vm90 = vcmp.gt.f32.partialorder %v62, -1e+29
    %vm91 = vcmp.gt.f32.partialorder %v64, -1e+29
    %vm92 = vcmp.gt.f32.partialorder %v66, -1e+29
    %vm93 = vcmp.gt.f32.partialorder %v68, -1e+29
    %vm94 = vcmp.gt.f32.partialorder %v70, -1e+29
    %vm95 = vcmp.gt.f32.partialorder %v72, -1e+29
    %vm96 = vcmp.gt.f32.partialorder %v74, -1e+29
    %vm97 = vcmp.gt.f32.partialorder %v76, -1e+29
    %vm98 = vcmp.gt.f32.partialorder %v78, -1e+29
    %vm99 = vcmp.gt.f32.partialorder %v80, -1e+29
    %vm100 = vcmp.gt.f32.partialorder %v82, -1e+29
    %vm101 = vcmp.gt.f32.partialorder %v84, -1e+29
    %vm102 = vcmp.gt.f32.partialorder %v86, -1e+29
    %v103 = vsel %vm87, %v56, 0.0
    %v104 = vsel %vm88, %v58, 0.0
    %v105 = vsel %vm89, %v60, 0.0
    %v106 = vsel %vm90, %v62, 0.0
    %v107 = vsel %vm91, %v64, 0.0
    %v108 = vsel %vm92, %v66, 0.0
    %v109 = vsel %vm93, %v68, 0.0
    %v110 = vsel %vm94, %v70, 0.0
    %v111 = vsel %vm95, %v72, 0.0
    %v112 = vsel %vm96, %v74, 0.0
    %v113 = vsel %vm97, %v76, 0.0
    %v114 = vsel %vm98, %v78, 0.0
    %v115 = vsel %vm99, %v80, 0.0
    %v116 = vsel %vm100, %v82, 0.0
    %v117 = vsel %vm101, %v84, 0.0
    %v118 = vsel %vm102, %v86, 0.0
    %v119 = vsub.f32 %v39, %v103
    %v120 = vsub.f32 %v40, %v104
    %v121 = vsub.f32 %v41, %v105
    %v122 = vsub.f32 %v42, %v106
    %v123 = vsub.f32 %v43, %v107
    %v124 = vsub.f32 %v44, %v108
    %v125 = vsub.f32 %v45, %v109
    %v126 = vsub.f32 %v46, %v110
    %v127 = vsub.f32 %v47, %v111
    %v128 = vsub.f32 %v48, %v112
    %v129 = vsub.f32 %v49, %v113
    %v130 = vsub.f32 %v50, %v114
    %v131 = vsub.f32 %v51, %v115
    %v132 = vsub.f32 %v52, %v116
    %v133 = vsub.f32 %v53, %v117
    %v134 = vsub.f32 %v54, %v118
    %v135 = vmul.f32 %v119, 1.442695
    %v136 = vpow.pop %v135
    %v137 = vmul.f32 %v120, 1.442695
    %v138 = vpow.pop %v137
    %v139 = vmul.f32 %v121, 1.442695
    %v140 = vpow.pop %v139
    %v141 = vmul.f32 %v122, 1.442695
    %v142 = vpow.pop %v141
    %v143 = vmul.f32 %v123, 1.442695
    %v144 = vpow.pop %v143
    %v145 = vmul.f32 %v124, 1.442695
    %v146 = vpow.pop %v145
    %v147 = vmul.f32 %v125, 1.442695
    %v148 = vpow.pop %v147
    %v149 = vmul.f32 %v126, 1.442695
    %v150 = vpow.pop %v149
    %v151 = vmul.f32 %v127, 1.442695
    %v152 = vpow.pop %v151
    %v153 = vmul.f32 %v128, 1.442695
    %v154 = vpow.pop %v153
    %v155 = vmul.f32 %v129, 1.442695
    %v156 = vpow.pop %v155
    %v157 = vmul.f32 %v130, 1.442695
    %v158 = vpow.pop %v157
    %v159 = vmul.f32 %v131, 1.442695
    %v160 = vpow.pop %v159
    %v161 = vmul.f32 %v132, 1.442695
    %v162 = vpow.pop %v161
    %v163 = vmul.f32 %v133, 1.442695
    %v164 = vpow.pop %v163
    %v165 = vmul.f32 %v134, 1.442695
    %v166 = vpow.pop %v165
    %167 = vadd.xlane.f32.xlu0 %v136
    %v168 = vpop.xlane.xlu0 %167
    %169 = vadd.xlane.f32.xlu0 %v138
    %v170 = vpop.xlane.xlu0 %169
    %171 = vadd.xlane.f32.xlu0 %v140
    %v172 = vpop.xlane.xlu0 %171
    %173 = vadd.xlane.f32.xlu0 %v142
    %v174 = vpop.xlane.xlu0 %173
    %175 = vadd.xlane.f32.xlu0 %v144
    %v176 = vpop.xlane.xlu0 %175
    %177 = vadd.xlane.f32.xlu0 %v146
    %v178 = vpop.xlane.xlu0 %177
    %179 = vadd.xlane.f32.xlu0 %v148
    %v180 = vpop.xlane.xlu0 %179
    %181 = vadd.xlane.f32.xlu0 %v150
    %v182 = vpop.xlane.xlu0 %181
    %183 = vadd.xlane.f32.xlu0 %v152
    %v184 = vpop.xlane.xlu0 %183
    %185 = vadd.xlane.f32.xlu0 %v154
    %v186 = vpop.xlane.xlu0 %185
    %187 = vadd.xlane.f32.xlu0 %v156
    %v188 = vpop.xlane.xlu0 %187
    %189 = vadd.xlane.f32.xlu0 %v158
    %v190 = vpop.xlane.xlu0 %189
    %191 = vadd.xlane.f32.xlu0 %v160
    %v192 = vpop.xlane.xlu0 %191
    %193 = vadd.xlane.f32.xlu0 %v162
    %v194 = vpop.xlane.xlu0 %193
    %195 = vadd.xlane.f32.xlu0 %v164
    %v196 = vpop.xlane.xlu0 %195
    %197 = vadd.xlane.f32.xlu0 %v166
    %v198 = vpop.xlane.xlu0 %197
    %vm199 = vcmp.eq.f32.partialorder %v168, 0.0
    %vm200 = vcmp.eq.f32.partialorder %v170, 0.0
    %vm201 = vcmp.eq.f32.partialorder %v172, 0.0
    %vm202 = vcmp.eq.f32.partialorder %v174, 0.0
    %vm203 = vcmp.eq.f32.partialorder %v176, 0.0
    %vm204 = vcmp.eq.f32.partialorder %v178, 0.0
    %vm205 = vcmp.eq.f32.partialorder %v180, 0.0
    %vm206 = vcmp.eq.f32.partialorder %v182, 0.0
    %vm207 = vcmp.eq.f32.partialorder %v184, 0.0
    %vm208 = vcmp.eq.f32.partialorder %v186, 0.0
    %vm209 = vcmp.eq.f32.partialorder %v188, 0.0
    %vm210 = vcmp.eq.f32.partialorder %v190, 0.0
    %vm211 = vcmp.eq.f32.partialorder %v192, 0.0
    %vm212 = vcmp.eq.f32.partialorder %v194, 0.0
    %vm213 = vcmp.eq.f32.partialorder %v196, 0.0
    %vm214 = vcmp.eq.f32.partialorder %v198, 0.0
    %v215 = vsel %vm199, 1.0, %v168
    %v216 = vsel %vm200, 1.0, %v170
    %v217 = vsel %vm201, 1.0, %v172
    %v218 = vsel %vm202, 1.0, %v174
    %v219 = vsel %vm203, 1.0, %v176
    %v220 = vsel %vm204, 1.0, %v178
    %v221 = vsel %vm205, 1.0, %v180
    %v222 = vsel %vm206, 1.0, %v182
    %v223 = vsel %vm207, 1.0, %v184
    %v224 = vsel %vm208, 1.0, %v186
    %v225 = vsel %vm209, 1.0, %v188
    %v226 = vsel %vm210, 1.0, %v190
    %v227 = vsel %vm211, 1.0, %v192
    %v228 = vsel %vm212, 1.0, %v194
    %v229 = vsel %vm213, 1.0, %v196
    %v230 = vsel %vm214, 1.0, %v198
    %v231 = vrcp.pop %v215
    %v232 = vrcp.pop %v216
    %v233 = vrcp.pop %v217
    %v234 = vrcp.pop %v218
    %v235 = vrcp.pop %v219
    %v236 = vrcp.pop %v220
    %v237 = vrcp.pop %v221
    %v238 = vrcp.pop %v222
    %v239 = vrcp.pop %v223
    %v240 = vrcp.pop %v224
    %v241 = vrcp.pop %v225
    %v242 = vrcp.pop %v226
    %v243 = vrcp.pop %v227
    %v244 = vrcp.pop %v228
    %v245 = vrcp.pop %v229
    %v246 = vrcp.pop %v230
    %v247 = vmul.f32 %v136, %v231
    %v248 = vmul.f32 %v138, %v232
    %v249 = vmul.f32 %v140, %v233
    %v250 = vmul.f32 %v142, %v234
    %v251 = vmul.f32 %v144, %v235
    %v252 = vmul.f32 %v146, %v236
    %v253 = vmul.f32 %v148, %v237
    %v254 = vmul.f32 %v150, %v238
    %v255 = vmul.f32 %v152, %v239
    %v256 = vmul.f32 %v154, %v240
    %v257 = vmul.f32 %v156, %v241
    %v258 = vmul.f32 %v158, %v242
    %v259 = vmul.f32 %v160, %v243
    %v260 = vmul.f32 %v162, %v244
    %v261 = vmul.f32 %v164, %v245
    %v262 = vmul.f32 %v166, %v246
    %v263 = vpack.c.bf16 %v248, %v247
    %v264 = vpack.c.bf16 %v250, %v249
    %v265 = vpack.c.bf16 %v252, %v251
    %v266 = vpack.c.bf16 %v254, %v253
    %v267 = vpack.c.bf16 %v256, %v255
    %v268 = vpack.c.bf16 %v258, %v257
    %v269 = vpack.c.bf16 %v260, %v259
    %v270 = vpack.c.bf16 %v262, %v261
    %v279 = vunpack.c.l.b16 %v263
    %v280 = vunpack.c.h.b16 %v263
    %v281 = vunpack.c.l.b16 %v264
    %v282 = vunpack.c.h.b16 %v264
    %v283 = vunpack.c.l.b16 %v265
    %v284 = vunpack.c.h.b16 %v265
    %v285 = vunpack.c.l.b16 %v266
    %v286 = vunpack.c.h.b16 %v266
    %v287 = vunpack.c.l.b16 %v267
    %v288 = vunpack.c.h.b16 %v267
    %v289 = vunpack.c.l.b16 %v268
    %v290 = vunpack.c.h.b16 %v268
    %v291 = vunpack.c.l.b16 %v269
    %v292 = vunpack.c.h.b16 %v269
    %v293 = vunpack.c.l.b16 %v270
    %v294 = vunpack.c.h.b16 %v270
    %v295 = vpack.c.b16 %v279, %v279
    %v296 = vpack.c.b16 %v280, %v280
    %v297 = vpack.c.b16 %v281, %v281
    %v298 = vpack.c.b16 %v282, %v282
    %v299 = vpack.c.b16 %v283, %v283
    %v300 = vpack.c.b16 %v284, %v284
    %v301 = vpack.c.b16 %v285, %v285
    %v302 = vpack.c.b16 %v286, %v286
    %v303 = vpack.c.b16 %v287, %v287
    %v304 = vpack.c.b16 %v288, %v288
    %v305 = vpack.c.b16 %v289, %v289
    %v306 = vpack.c.b16 %v290, %v290
    %v307 = vpack.c.b16 %v291, %v291
    %v308 = vpack.c.b16 %v292, %v292
    %v309 = vpack.c.b16 %v293, %v293
    %v310 = vpack.c.b16 %v294, %v294
    %327 = vst [vmem:[#allocation5] sm:$0xf] %v295
    %328 = vst [vmem:[#allocation5 + $0x4] sm:$0xf] %v296
    %329 = vst [vmem:[#allocation5 + $0x8] sm:$0xf] %v297
    %330 = vst [vmem:[#allocation5 + $0xc] sm:$0xf] %v298
    %331 = vst [vmem:[#allocation5 + $0x10] sm:$0xf] %v299
    %332 = vst [vmem:[#allocation5 + $0x14] sm:$0xf] %v300
    %333 = vst [vmem:[#allocation5 + $0x18] sm:$0xf] %v301
    %334 = vst [vmem:[#allocation5 + $0x1c] sm:$0xf] %v302
    %335 = vst [vmem:[#allocation5 + $0x20] sm:$0xf] %v303
    %336 = vst [vmem:[#allocation5 + $0x24] sm:$0xf] %v304
    %337 = vst [vmem:[#allocation5 + $0x28] sm:$0xf] %v305
    %338 = vst [vmem:[#allocation5 + $0x2c] sm:$0xf] %v306
    %339 = vst [vmem:[#allocation5 + $0x30] sm:$0xf] %v307
    %340 = vst [vmem:[#allocation5 + $0x34] sm:$0xf] %v308
    %341 = vst [vmem:[#allocation5 + $0x38] sm:$0xf] %v309
    %342 = vst [vmem:[#allocation5 + $0x3c] sm:$0xf] %v310
    // Predicated region
    $region10: #{tpu_custom_call.1} parent=1 // pred_check
      _
    $region11: #{tpu_custom_call.1} parent=1 // pred_check_branch
      %344 = sbr.rel (0) target = $region13
    $region12: #{tpu_custom_call.1} parent=1 // pred_region
      %s346 = ssub.s32 1024, 1024
      %347 = vsyncadd [#allocation4], %s346
      %s348 = sshll.u32 [#allocation5], 4
      %s349 = int_to_ptr.vmem [resolvable:$true] %s348
      %354 = dma.vmem_to_hbm [thread:$0]  %s349, 1024, %s1, [#allocation4], 64, 64, 4
    $region13: #{tpu_custom_call.1} parent=1 // pred_fallthru
      _
    // Predicated region
    $region14: #{tpu_custom_call.1} parent=1 // pred_check
      _
    $region15: #{tpu_custom_call.1} parent=1 // pred_check_branch
      %356 = sbr.rel (0) target = $region17
    $region16: #{tpu_custom_call.1} parent=1 // pred_region
      %357 = dma.done [#allocation4], 1024
    $region17: #{tpu_custom_call.1} parent=1 // pred_fallthru
      _
    %358 = vsyncpa [#allocation3], 1
    %359 = vsyncpa [#allocation4], 1

</llo_original>
